<compile_context>
chip_gen: v7x
topology: tpu7x:2x2x1
jax: 0.10.0
libtpu: 0.0.40
codegen_flags: <defaults>
</compile_context>

<pallas_src>
import numpy as np
import jax
import jax.numpy as jnp
from jax import lax
from jax.experimental import pallas as pl
from jax.experimental.pallas import tpu as pltpu


def _backproject_kernel(invk_ref, depth_ref, out_ref):
    # invk_ref : SMEM (B*9,)        f32  row-major 3x3 block of inv_K per batch
    # depth_ref: VMEM (1, TH, W)    f32  depth row-band
    # out_ref  : VMEM (1, 4, TH, W) f32  homogeneous cam points row-band
    b = pl.program_id(0)
    ih = pl.program_id(1)

    d = depth_ref[0]                      # (TH, W)
    th, w = d.shape

    # Pixel coordinates generated in-kernel (meshgrid indexing='xy':
    # x = column index, y = row index).  Row/column vectors only; the FMAs
    # below broadcast them to (TH, W).
    y = (lax.broadcasted_iota(jnp.int32, (th, 1), 0) + ih * th).astype(jnp.float32)
    x = lax.broadcasted_iota(jnp.int32, (1, w), 1).astype(jnp.float32)

    base = b * 9
    k00 = invk_ref[base + 0]; k01 = invk_ref[base + 1]; k02 = invk_ref[base + 2]
    k10 = invk_ref[base + 3]; k11 = invk_ref[base + 4]; k12 = invk_ref[base + 5]
    k20 = invk_ref[base + 6]; k21 = invk_ref[base + 7]; k22 = invk_ref[base + 8]

    # Direct per-channel stores (no concatenate / stack temporaries).
    out_ref[0, 0] = d * (k00 * x + k01 * y + k02)
    out_ref[0, 1] = d * (k10 * x + k11 * y + k12)
    out_ref[0, 2] = d * (k20 * x + k21 * y + k22)
    out_ref[0, 3] = jnp.ones_like(d)


def _vmem_budget_bytes():
    """(vmem_limit_bytes, pipeline_budget_bytes) sized per TPU generation."""
    try:
        cap = int(pltpu.get_tpu_info().vmem_capacity_bytes)
    except Exception:
        cap = 64 << 20          # conservative (v7x-sized) fallback
    vmem_limit = min(cap // 2, 64 << 20)   # 64 MiB on v5e/v6e, 32 MiB on v7x
    budget = (vmem_limit * 3) // 4         # headroom for compiler scratch
    return vmem_limit, budget


def _pick_th(H, W, B, budget_bytes):
    """Row-band height: largest multiple of 8 whose double-buffered
    (depth + 4-channel output) footprint fits the budget; full H if it fits."""
    # per-step footprint = 2 buffers * (4 + 16) bytes/pixel * TH * W
    max_th = max(8, budget_bytes // (40 * W))
    if max_th >= H:
        th = H
    else:
        th = max(8, (max_th // 8) * 8)

    # Keep >=2 grid steps on a parallel axis so both v7x TensorCores get work.
    n_h = -(-H // th)
    if B == 1 and n_h == 1 and H > 8:
        half = (((H + 1) // 2) + 7) // 8 * 8
        if half < H:
            th = half
    return th


def backproject_depth(depth, inv_K, height, width):
    """depth: (B, 1, H, W) f32; inv_K: (B, 4, 4) f32 -> (B, 4, H*W) f32."""
    B = depth.shape[0]
    H, W = height, width

    depth3 = depth.reshape(B, H, W).astype(jnp.float32)                # squeeze C=1
    invk_flat = inv_K[:, :3, :3].reshape(B * 9).astype(jnp.float32)    # 1D SMEM (no 2D padding)

    vmem_limit, budget = _vmem_budget_bytes()
    th = _pick_th(H, W, B, budget)
    n_h = -(-H // th)                 # cdiv; edge bands are masked by Pallas
    grid = (B, n_h)

    grid_spec = pltpu.PrefetchScalarGridSpec(
        num_scalar_prefetch=1,        # inv_K scalars -> SMEM
        grid=grid,
        in_specs=[
            pl.BlockSpec((1, th, W), lambda b, i, invk: (b, i, 0)),
        ],
        out_specs=pl.BlockSpec((1, 4, th, W), lambda b, i, invk: (b, 0, i, 0)),
    )

    cost = pl.CostEstimate(
        flops=15 * B * H * W,
        transcendentals=0,
        bytes_accessed=20 * B * H * W + 36 * B,
    )

    out4 = pl.pallas_call(
        _backproject_kernel,
        out_shape=jax.ShapeDtypeStruct((B, 4, H, W), jnp.float32),
        grid_spec=grid_spec,
        compiler_params=pltpu.CompilerParams(
            dimension_semantics=("parallel", "parallel"),
            vmem_limit_bytes=vmem_limit),
        cost_estimate=cost,
    )(invk_flat, depth3)

    # Free (contiguous) metadata reshape back to the PyTorch output layout.
    return out4.reshape(B, 4, H * W)


def _reference(depth, inv_K, height, width):
    """Pure-JAX reference with exact f32 elementwise math (same as PyTorch)."""
    B = depth.shape[0]
    HW = height * width
    xs, ys = jnp.meshgrid(
        jnp.arange(width, dtype=jnp.float32),
        jnp.arange(height, dtype=jnp.float32),
        indexing="xy",
    )
    x = xs.reshape(1, 1, HW)
    y = ys.reshape(1, 1, HW)
    k = inv_K[:, :3, :3].astype(jnp.float32)                      # (B, 3, 3)
    cam = k[:, :, 0:1] * x + k[:, :, 1:2] * y + k[:, :, 2:3]       # (B, 3, HW)
    cam = depth.reshape(B, 1, HW) * cam
    ones = jnp.ones((B, 1, HW), jnp.float32)
    return jnp.concatenate([cam, ones], axis=1)


if __name__ == "__main__":
    B, H, W = 2, 16, 16
    key = jax.random.PRNGKey(0)
    k1, k2 = jax.random.split(key)

    depth = jax.random.uniform(k1, (B, 1, H, W), jnp.float32, 0.1, 10.0)

    # Deterministic invertible intrinsics -> 4x4 inverse (as used by the model).
    fx, fy, cx, cy = 0.58 * W, 1.92 * H, 0.5 * W, 0.5 * H
    K = np.eye(4, dtype=np.float32)
    K[0, 0], K[1, 1], K[0, 2], K[1, 2] = fx, fy, cx, cy
    inv_K_single = np.linalg.inv(K).astype(np.float32)
    inv_K = jnp.asarray(np.stack([inv_K_single] * B, axis=0))
    # small per-batch perturbation so the batch dimension is non-trivial
    inv_K = inv_K + 1e-3 * jax.random.normal(k2, (B, 4, 4), jnp.float32)

    out = backproject_depth(depth, inv_K, H, W)
    out = jax.block_until_ready(out)

    ref = _reference(depth, inv_K, H, W)
    np.testing.assert_allclose(np.asarray(out), np.asarray(ref), rtol=1e-5, atol=1e-5)

    print("KERNEL_OK")
</pallas_src>

<mosaic_0001>
module attributes {stable_mosaic.version = 11 : i64} {
  func.func @_backproject_kernel(%arg0: i32, %arg1: i32, %arg2: memref<18xf32, #tpu.memory_space<smem>>, %arg3: memref<1x16x16xf32, #tpu.memory_space<vmem>>, %arg4: memref<1x4x16x16xf32, #tpu.memory_space<vmem>>) attributes {dimension_semantics = [#tpu.dimension_semantics<parallel>, #tpu.dimension_semantics<parallel>], iteration_bounds = array<i64: 2, 1>, scalar_prefetch = 1 : i64, scratch_operands = 0 : i64, tpu.core_type = #tpu.core_type<tc>, window_params = [{transform_indices = @transform_0, window_bounds = array<i64: 1, 16, 16>}, {transform_indices = @transform_1, window_bounds = array<i64: 1, 4, 16, 16>}]} {
    %c0 = arith.constant 0 : index
    %c0_0 = arith.constant 0 : index
    %c0_1 = arith.constant 0 : index
    %0 = vector.load %arg3[%c0, %c0_0, %c0_1] : memref<1x16x16xf32, #tpu.memory_space<vmem>>, vector<1x16x16xf32>
    %1 = vector.shape_cast %0 : vector<1x16x16xf32> to vector<16x16xf32>
    %2 = tpu.iota {dimensions = array<i32: 0>} : vector<16x1xi32>
    %c16_i32 = arith.constant 16 : i32
    %3 = arith.muli %arg1, %c16_i32 : i32
    %4 = vector.broadcast %3 : i32 to vector<16x1xi32>
    %5 = arith.addi %2, %4 : vector<16x1xi32>
    %6 = arith.sitofp %5 : vector<16x1xi32> to vector<16x1xf32>
    %7 = tpu.iota {dimensions = array<i32: 1>} : vector<1x16xi32>
    %8 = arith.sitofp %7 : vector<1x16xi32> to vector<1x16xf32>
    %c9_i32 = arith.constant 9 : i32
    %9 = arith.muli %arg0, %c9_i32 : i32
    %c0_i32 = arith.constant 0 : i32
    %10 = arith.addi %9, %c0_i32 : i32
    %11 = arith.index_cast %10 : i32 to index
    %12 = memref.load %arg2[%11] : memref<18xf32, #tpu.memory_space<smem>>
    %c1_i32 = arith.constant 1 : i32
    %13 = arith.addi %9, %c1_i32 : i32
    %14 = arith.index_cast %13 : i32 to index
    %15 = memref.load %arg2[%14] : memref<18xf32, #tpu.memory_space<smem>>
    %c2_i32 = arith.constant 2 : i32
    %16 = arith.addi %9, %c2_i32 : i32
    %17 = arith.index_cast %16 : i32 to index
    %18 = memref.load %arg2[%17] : memref<18xf32, #tpu.memory_space<smem>>
    %c3_i32 = arith.constant 3 : i32
    %19 = arith.addi %9, %c3_i32 : i32
    %20 = arith.index_cast %19 : i32 to index
    %21 = memref.load %arg2[%20] : memref<18xf32, #tpu.memory_space<smem>>
    %c4_i32 = arith.constant 4 : i32
    %22 = arith.addi %9, %c4_i32 : i32
    %23 = arith.index_cast %22 : i32 to index
    %24 = memref.load %arg2[%23] : memref<18xf32, #tpu.memory_space<smem>>
    %c5_i32 = arith.constant 5 : i32
    %25 = arith.addi %9, %c5_i32 : i32
    %26 = arith.index_cast %25 : i32 to index
    %27 = memref.load %arg2[%26] : memref<18xf32, #tpu.memory_space<smem>>
    %c6_i32 = arith.constant 6 : i32
    %28 = arith.addi %9, %c6_i32 : i32
    %29 = arith.index_cast %28 : i32 to index
    %30 = memref.load %arg2[%29] : memref<18xf32, #tpu.memory_space<smem>>
    %c7_i32 = arith.constant 7 : i32
    %31 = arith.addi %9, %c7_i32 : i32
    %32 = arith.index_cast %31 : i32 to index
    %33 = memref.load %arg2[%32] : memref<18xf32, #tpu.memory_space<smem>>
    %c8_i32 = arith.constant 8 : i32
    %34 = arith.addi %9, %c8_i32 : i32
    %35 = arith.index_cast %34 : i32 to index
    %36 = memref.load %arg2[%35] : memref<18xf32, #tpu.memory_space<smem>>
    %37 = vector.broadcast %12 : f32 to vector<1x16xf32>
    %38 = arith.mulf %37, %8 : vector<1x16xf32>
    %39 = vector.broadcast %15 : f32 to vector<16x1xf32>
    %40 = arith.mulf %39, %6 : vector<16x1xf32>
    %41 = vector.broadcast %38 : vector<1x16xf32> to vector<16x16xf32>
    %42 = vector.broadcast %40 : vector<16x1xf32> to vector<16x16xf32>
    %43 = arith.addf %41, %42 : vector<16x16xf32>
    %44 = vector.broadcast %18 : f32 to vector<16x16xf32>
    %45 = arith.addf %43, %44 : vector<16x16xf32>
    %46 = arith.mulf %1, %45 : vector<16x16xf32>
    %c0_2 = arith.constant 0 : index
    %c0_3 = arith.constant 0 : index
    %c0_4 = arith.constant 0 : index
    %c0_5 = arith.constant 0 : index
    %47 = vector.load %arg4[%c0_2, %c0_3, %c0_4, %c0_5] : memref<1x4x16x16xf32, #tpu.memory_space<vmem>>, vector<1x1x16x16xf32>
    %48 = vector.shape_cast %47 : vector<1x1x16x16xf32> to vector<16x16xf32>
    %49 = vector.shape_cast %46 : vector<16x16xf32> to vector<1x1x16x16xf32>
    tpu.vector_store %arg4[%c0_2, %c0_3, %c0_4, %c0_5], %49 {strides = array<i32>} : memref<1x4x16x16xf32, #tpu.memory_space<vmem>>, vector<1x1x16x16xf32>,
    %50 = vector.broadcast %21 : f32 to vector<1x16xf32>
    %51 = arith.mulf %50, %8 : vector<1x16xf32>
    %52 = vector.broadcast %24 : f32 to vector<16x1xf32>
    %53 = arith.mulf %52, %6 : vector<16x1xf32>
    %54 = vector.broadcast %51 : vector<1x16xf32> to vector<16x16xf32>
    %55 = vector.broadcast %53 : vector<16x1xf32> to vector<16x16xf32>
    %56 = arith.addf %54, %55 : vector<16x16xf32>
    %57 = vector.broadcast %27 : f32 to vector<16x16xf32>
    %58 = arith.addf %56, %57 : vector<16x16xf32>
    %59 = arith.mulf %1, %58 : vector<16x16xf32>
    %c0_6 = arith.constant 0 : index
    %c1 = arith.constant 1 : index
    %c0_7 = arith.constant 0 : index
    %c0_8 = arith.constant 0 : index
    %60 = vector.load %arg4[%c0_6, %c1, %c0_7, %c0_8] : memref<1x4x16x16xf32, #tpu.memory_space<vmem>>, vector<1x1x16x16xf32>
    %61 = vector.shape_cast %60 : vector<1x1x16x16xf32> to vector<16x16xf32>
    %62 = vector.shape_cast %59 : vector<16x16xf32> to vector<1x1x16x16xf32>
    tpu.vector_store %arg4[%c0_6, %c1, %c0_7, %c0_8], %62 {strides = array<i32>} : memref<1x4x16x16xf32, #tpu.memory_space<vmem>>, vector<1x1x16x16xf32>,
    %63 = vector.broadcast %30 : f32 to vector<1x16xf32>
    %64 = arith.mulf %63, %8 : vector<1x16xf32>
    %65 = vector.broadcast %33 : f32 to vector<16x1xf32>
    %66 = arith.mulf %65, %6 : vector<16x1xf32>
    %67 = vector.broadcast %64 : vector<1x16xf32> to vector<16x16xf32>
    %68 = vector.broadcast %66 : vector<16x1xf32> to vector<16x16xf32>
    %69 = arith.addf %67, %68 : vector<16x16xf32>
    %70 = vector.broadcast %36 : f32 to vector<16x16xf32>
    %71 = arith.addf %69, %70 : vector<16x16xf32>
    %72 = arith.mulf %1, %71 : vector<16x16xf32>
    %c0_9 = arith.constant 0 : index
    %c2 = arith.constant 2 : index
    %c0_10 = arith.constant 0 : index
    %c0_11 = arith.constant 0 : index
    %73 = vector.load %arg4[%c0_9, %c2, %c0_10, %c0_11] : memref<1x4x16x16xf32, #tpu.memory_space<vmem>>, vector<1x1x16x16xf32>
    %74 = vector.shape_cast %73 : vector<1x1x16x16xf32> to vector<16x16xf32>
    %75 = vector.shape_cast %72 : vector<16x16xf32> to vector<1x1x16x16xf32>
    tpu.vector_store %arg4[%c0_9, %c2, %c0_10, %c0_11], %75 {strides = array<i32>} : memref<1x4x16x16xf32, #tpu.memory_space<vmem>>, vector<1x1x16x16xf32>,
    %cst = arith.constant 1.000000e+00 : f32
    %76 = vector.broadcast %cst : f32 to vector<16x16xf32>
    %c0_12 = arith.constant 0 : index
    %c3 = arith.constant 3 : index
    %c0_13 = arith.constant 0 : index
    %c0_14 = arith.constant 0 : index
    %77 = vector.load %arg4[%c0_12, %c3, %c0_13, %c0_14] : memref<1x4x16x16xf32, #tpu.memory_space<vmem>>, vector<1x1x16x16xf32>
    %78 = vector.shape_cast %77 : vector<1x1x16x16xf32> to vector<16x16xf32>
    %79 = vector.shape_cast %76 : vector<16x16xf32> to vector<1x1x16x16xf32>
    tpu.vector_store %arg4[%c0_12, %c3, %c0_13, %c0_14], %79 {strides = array<i32>} : memref<1x4x16x16xf32, #tpu.memory_space<vmem>>, vector<1x1x16x16xf32>,
    return
  }
  func.func @transform_0(%arg0: i32, %arg1: i32, %arg2: memref<18xf32, #tpu.memory_space<smem>>) -> (i32, i32, i32) {
    %c0_i32 = arith.constant 0 : i32
    %c0_i32_0 = arith.constant 0 : i32
    return %arg0, %arg1, %c0_i32 : i32, i32, i32
  }
  func.func @transform_1(%arg0: i32, %arg1: i32, %arg2: memref<18xf32, #tpu.memory_space<smem>>) -> (i32, i32, i32, i32) {
    %c0_i32 = arith.constant 0 : i32
    %c0_i32_0 = arith.constant 0 : i32
    %c0_i32_1 = arith.constant 0 : i32
    return %arg0, %c0_i32, %arg1, %c0_i32_0 : i32, i32, i32, i32
  }
}

</mosaic_0001>

<llo_original>
// kernel: tpu_custom_call.1
$region0: #{tpu_custom_call.1}
  #allocation0 [shape = 'u32[]', space=smem, size = 0x4, offset = 0x4, fixed_abs, tag = 'smem constant byte address 0x4 - core index']
  #allocation1 [shape = 'u32[144,128]{1,0:T(1,128)}', space=vmem, size = 0x12000, scoped, tag = 'internal scratch']
  #allocation2 [shape = 's32[1]{0}', space=sflag, size = 0x4, scoped, tag = 'scoped memory for tpu_custom_call.1']
  #allocation3 [shape = 'u8[512]{0}', space=smem, size = 0x200, scoped, tag = 'prefetched SMEM operand 0']
  %s0 = inlined_call_operand.hbm [shape: f32[18], index: 0, kind: input, shape index: {}]
  %s1 = inlined_call_operand.hbm [shape: f32[2,16,16], index: 1, kind: input, shape index: {}]
  %s2 = inlined_call_operand.hbm [shape: f32[2,4,16,16], index: 2, kind: output, shape index: {}]
  %s3 = sld [smem:[#allocation0]]
  $region41: #{tpu_custom_call.1} parent=0
    _
  %s5 = ssub.s32 1, %s3
  %s6 = scalar_select 0, %s5, %s3
  %8 = dma.hbm_to_smem %s0, 16, [#allocation3], [#allocation2]
  %9 = dma.done [#allocation2], 16
  %10 = sfence
  $region1: #{tpu_custom_call.1} parent=0
    #allocation4 [shape = 'u8[16384]{0}', space=vmem, size = 0x4000, scoped, tag = 'input window, operand 1']
    #allocation5 [shape = 's32[2]{0}', space=sflag, size = 0x8, scoped, tag = 'scoped memory for tpu_custom_call.1']
    #allocation6 [shape = 's32[2]{0}', space=sflag, size = 0x8, scoped, tag = 'scoped memory for tpu_custom_call.1']
    #allocation7 [shape = 'u8[65536]{0}', space=vmem, size = 0x10000, scoped, tag = 'output window, operand 0']
    %11 = vsyncpa [#allocation5], 0
    %s12 = scalar_lea.sflag [#allocation5], 1
    %13 = vsyncpa %s12, 0
    %14 = vsyncpa [#allocation6], 0
    %s15 = scalar_lea.sflag [#allocation6], 1
    %16 = vsyncpa %s15, 0
    loop: start=0, step=1, limit=4
    $region2: #{tpu_custom_call.1} parent=1 // loop_pre_header
      _
    $region3: #{tpu_custom_call.1} parent=1 // loop_header
      %s18 = sphi 0, %s22
      %p19 = scmp.ge.s32.totalorder %s18, 4
      %s25 = sphi 0, %s37
      %s26 = sphi 0, %s33
      %s27 = sphi 0, %s25
      %s28 = sphi 0, %s26
      %s29 = sphi 0, %s27
      %s30 = sphi 0, %s28
      %s42 = sphi 0, %s44
      %s45 = sphi 0, %s42
      %s46 = sphi 0, %s45
      %s62 = sphi 0, %s46
      %s70 = sphi 0, %s72
      %s73 = sphi 0, %s70
      %s74 = sphi 0, %s73
      %s90 = sphi 0, %s74
    $region4: #{tpu_custom_call.1} parent=1 // loop_header_branch
      %21 = sbr.rel (%p19) target = $region8
    $region5: #{tpu_custom_call.1} parent=1 // loop_body
      %s23 = ssub.s32 %s18, 1
      %s24 = ssub.s32 %s18, 2
      %s31 = sadd.s32 1, %s26
      %p32 = scmp.ge.s32.totalorder %s31, 1
      %s33 = scalar_select %p32, 0, %s31
      %s34 = sadd.s32 1, %s25
      %s35 = scalar_select %p32, %s34, %s25
      %p36 = scmp.ge.s32.totalorder %s35, 2
      %s37 = scalar_select %p36, 0, %s35
      %s38 = ssub.s32 %s25, %s37
      %s39 = ssub.s32 %s26, %s33
      %s40 = sor.u32 %s38, %s39
      %p41 = scmp.eq.s32.totalorder %s40, 0
      %s43 = sadd.s32 %s42, 1
      %s44 = scalar_select %p41, %s42, %s43
      %p47 = pneg %p41
      %p48 = scmp.eq.s32.totalorder %s18, 1
      %p49 = por %p47, %p48
      %p50 = scmp.ne.s32.totalorder %s42, %s45
      %p51 = scmp.eq.s32.totalorder %s18, 0
      %p52 = por %p50, %p51
      %p53 = scmp.ne.s32.totalorder %s42, %s45
      %p54 = scmp.eq.s32.totalorder %s23, 1
      %p55 = por %p53, %p54
      %p56 = scmp.ne.s32.totalorder %s45, %s46
      %p57 = scmp.eq.s32.totalorder %s23, 0
      %p58 = por %p56, %p57
      %p59 = scmp.ne.s32.totalorder %s45, %s46
      %p60 = scmp.eq.s32.totalorder %s24, 1
      %p61 = por %p59, %p60
      %p63 = scmp.ne.s32.totalorder %s46, %s62
      %p64 = scmp.eq.s32.totalorder %s24, 0
      %p65 = por %p63, %p64
      %s66 = ssub.s32 %s25, %s37
      %s67 = ssub.s32 %s26, %s33
      %s68 = sor.u32 %s66, %s67
      %p69 = scmp.eq.s32.totalorder %s68, 0
      %s71 = sadd.s32 %s70, 1
      %s72 = scalar_select %p69, %s70, %s71
      %p75 = pneg %p69
      %p76 = scmp.eq.s32.totalorder %s18, 1
      %p77 = por %p75, %p76
      %p78 = scmp.ne.s32.totalorder %s70, %s73
      %p79 = scmp.eq.s32.totalorder %s18, 0
      %p80 = por %p78, %p79
      %p81 = scmp.ne.s32.totalorder %s70, %s73
      %p82 = scmp.eq.s32.totalorder %s23, 1
      %p83 = por %p81, %p82
      %p84 = scmp.ne.s32.totalorder %s73, %s74
      %p85 = scmp.eq.s32.totalorder %s23, 0
      %p86 = por %p84, %p85
      %p87 = scmp.ne.s32.totalorder %s73, %s74
      %p88 = scmp.eq.s32.totalorder %s24, 1
      %p89 = por %p87, %p88
      %p91 = scmp.ne.s32.totalorder %s74, %s90
      %p92 = scmp.eq.s32.totalorder %s24, 0
      %p93 = por %p91, %p92
      %p94 = scmp.le.s32.totalorder 1, %s18
      %p95 = scmp.lt.s32.totalorder %s18, 3
      %p96 = pnand %p94, %p95
      %p97 = pneg %p96
      // Predicated region
      $region9: #{tpu_custom_call.1} parent=5 // pred_check
        _
      $region10: #{tpu_custom_call.1} parent=5 // pred_check_branch
        %99 = sbr.rel (%p96) target = $region12
      $region11: #{tpu_custom_call.1} parent=5 // pred_region
        %s100 = ssub.s32 %s18, 1
      $region12: #{tpu_custom_call.1} parent=5 // pred_fallthru
        _
      %p101 = scmp.lt.s32.totalorder %s18, 2
      // Predicated region
      $region13: #{tpu_custom_call.1} parent=5 // pred_check
        %p102 = pneg %p101
      $region14: #{tpu_custom_call.1} parent=5 // pred_check_branch
        %104 = sbr.rel (%p102) target = $region16
      $region15: #{tpu_custom_call.1} parent=5 // pred_region
        // Predicated region
        $region17: #{tpu_custom_call.1} parent=15 // pred_check
          %p105 = pneg %p52
        $region18: #{tpu_custom_call.1} parent=15 // pred_check_branch
          %107 = sbr.rel (%p105) target = $region20
        $region19: #{tpu_custom_call.1} parent=15 // pred_region
          %s108 = sand.u32 %s42, 1
          %s109 = scalar_lea.sflag [#allocation5], %s108
          %s110 = sand.u32 %s42, 1
          %s111 = smul.addr %s110, 16
          %s112 = scalar_lea.vmem [#allocation4], %s111
          %s113 = smul.u32 2, %s26
          %s115 = ssub.s32 256, 256
          %116 = vsyncadd %s109, %s115
          %s117 = smul.addr %s25, 2
          %s118 = sadd.s32 %s113, %s117
          %s119 = smul.addr %s118, 128
          %s120 = scalar_lea.hbm %s1, %s119
          %s121 = sshll.u32 %s112, 4
          %s122 = int_to_ptr.vmem [resolvable:$true] %s121
          %127 = dma.hbm_to_vmem [thread:$0]  %s120, 256, %s122, %s109, 128, 128, 8
        $region20: #{tpu_custom_call.1} parent=15 // pred_fallthru
          _
      $region16: #{tpu_custom_call.1} parent=5 // pred_fallthru
        _
      %p128 = scmp.le.s32.totalorder 1, %s18
      %p129 = scmp.lt.s32.totalorder %s18, 3
      %p130 = pnand %p128, %p129
      %p131 = pneg %p130
      // Predicated region
      $region21: #{tpu_custom_call.1} parent=5 // pred_check
        _
      $region22: #{tpu_custom_call.1} parent=5 // pred_check_branch
        %133 = sbr.rel (%p130) target = $region24
      $region23: #{tpu_custom_call.1} parent=5 // pred_region
        %s134 = ssub.s32 %s18, 1
        %s135 = sand.u32 %s45, 1
        %s136 = scalar_lea.sflag [#allocation5], %s135
        %s137 = sand.u32 %s45, 1
        %s138 = smul.addr %s137, 16
        %s139 = scalar_lea.vmem [#allocation4], %s138
        // Predicated region
        $region25: #{tpu_custom_call.1} parent=23 // pred_check
          %p140 = pneg %p58
        $region26: #{tpu_custom_call.1} parent=23 // pred_check_branch
          %142 = sbr.rel (%p140) target = $region28
        $region27: #{tpu_custom_call.1} parent=23 // pred_region
          %143 = dma.done %s136, 256
        $region28: #{tpu_custom_call.1} parent=23 // pred_fallthru
          _
        %s144 = sand.u32 %s45, 1
        %s145 = scalar_lea.sflag [#allocation5], %s144
        %s146 = sand.u32 %s45, 1
        %s147 = smul.addr %s146, 16
        %s148 = scalar_lea.vmem [#allocation4], %s147
        %p149 = pneg %p58
        %p150 = pneg %p55
        %p151 = pneg %p86
        %p152 = pneg %p83
        %s153 = sand.u32 %s73, 1
        %s154 = scalar_lea.sflag [#allocation6], %s153
        %s155 = sand.u32 %s73, 1
        %s156 = smul.addr %s155, 64
        %s157 = scalar_lea.vmem [#allocation7], %s156
        %s158 = smul.u32 2, %s28
        %s159 = smul.u32 2, %s28
        %v160 = vld [vmem:[%s139] sm:$0xff]
        %v161 = vld [vmem:[%s139 + $0x8] sm:$0xff]
        %v162 = vlaneseq
        %v163 = vshrl.u32 %v162, 7
        %v164 = vadd.s32 %v163, 8
        %s165 = smul.u32 %s28, 16
        %v166 = vstv %s165
        %v167 = vadd.s32 %v163, %v166
        %v168 = vadd.s32 %v164, %v166
        %v169 = vcvt.s32.f32 %v167
        %v170 = vcvt.s32.f32 %v168
        %v171 = vlaneseq
        %v172 = vand.u32 %v171, 127
        %v173 = vcvt.s32.f32 %v172
        %s174 = smul.u32 %s27, 9
        %s175 = sld [smem:[#allocation3 + %s174]]
        %s176 = sadd.s32 %s174, 1
        %s177 = sld [smem:[#allocation3 + %s176]]
        %s178 = sadd.s32 %s174, 2
        %s179 = sld [smem:[#allocation3 + %s178]]
        %s180 = sadd.s32 %s174, 3
        %s181 = sld [smem:[#allocation3 + %s180]]
        %s182 = sadd.s32 %s174, 4
        %s183 = sld [smem:[#allocation3 + %s182]]
        %s184 = sadd.s32 %s174, 5
        %s185 = sld [smem:[#allocation3 + %s184]]
        %s186 = sadd.s32 %s174, 6
        %s187 = sld [smem:[#allocation3 + %s186]]
        %s188 = sadd.s32 %s174, 7
        %s189 = sld [smem:[#allocation3 + %s188]]
        %s190 = sadd.s32 %s174, 8
        %s191 = sld [smem:[#allocation3 + %s190]]
        %v192 = vstv %s175
        %v193 = vmul.f32 %v192, %v173
        %v194 = vstv %s177
        %v195 = vmul.f32 %v194, %v169
        %v196 = vmul.f32 %v194, %v170
        %v197 = vadd.f32 %v193, %v195
        %v198 = vadd.f32 %v193, %v196
        %v199 = vstv %s179
        %v200 = vadd.f32 %v197, %v199
        %v201 = vadd.f32 %v198, %v199
        %v202 = vmul.f32 %v160, %v200
        %v203 = vmul.f32 %v161, %v201
        %vm204 = vcmask 130048
        %205 = vst.msk [vmem:[%s157] sm:$0xff] %vm204, %v202
        %206 = vst.msk [vmem:[%s157 + $0x8] sm:$0xff] %vm204, %v203
        %v207 = vstv %s181
        %v208 = vmul.f32 %v207, %v173
        %v209 = vstv %s183
        %v210 = vmul.f32 %v209, %v169
        %v211 = vmul.f32 %v209, %v170
        %v212 = vadd.f32 %v208, %v210
        %v213 = vadd.f32 %v208, %v211
        %v214 = vstv %s185
        %v215 = vadd.f32 %v212, %v214
        %v216 = vadd.f32 %v213, %v214
        %v217 = vmul.f32 %v160, %v215
        %v218 = vmul.f32 %v161, %v216
        %s219 = scalar_lea.vmem %s157, 16 [#allocation7]
        %220 = vst.msk [vmem:[%s219] sm:$0xff] %vm204, %v217
        %221 = vst.msk [vmem:[%s219 + $0x8] sm:$0xff] %vm204, %v218
        %v222 = vstv %s187
        %v223 = vmul.f32 %v222, %v173
        %v224 = vstv %s189
        %v225 = vmul.f32 %v224, %v169
        %v226 = vmul.f32 %v224, %v170
        %v227 = vadd.f32 %v223, %v225
        %v228 = vadd.f32 %v223, %v226
        %v229 = vstv %s191
        %v230 = vadd.f32 %v227, %v229
        %v231 = vadd.f32 %v228, %v229
        %v232 = vmul.f32 %v160, %v230
        %v233 = vmul.f32 %v161, %v231
        %s234 = scalar_lea.vmem %s157, 32 [#allocation7]
        %235 = vst.msk [vmem:[%s234] sm:$0xff] %vm204, %v232
        %236 = vst.msk [vmem:[%s234 + $0x8] sm:$0xff] %vm204, %v233
        %s237 = scalar_lea.vmem %s157, 48 [#allocation7]
        %238 = vst.msk [vmem:[%s237] sm:$0xff] %vm204, 1.0
        %239 = vst.msk [vmem:[%s237 + $0x8] sm:$0xff] %vm204, 1.0
        %s240 = sand.u32 %s73, 1
        %s241 = scalar_lea.sflag [#allocation6], %s240
        %s242 = sand.u32 %s73, 1
        %s243 = smul.addr %s242, 64
        %s244 = scalar_lea.vmem [#allocation7], %s243
        // Predicated region
        $region29: #{tpu_custom_call.1} parent=23 // pred_check
          %p245 = pneg %p83
        $region30: #{tpu_custom_call.1} parent=23 // pred_check_branch
          %247 = sbr.rel (%p245) target = $region32
        $region31: #{tpu_custom_call.1} parent=23 // pred_region
          %s248 = smul.u32 2, %s28
          %s250 = ssub.s32 1024, 1024
          %251 = vsyncadd %s241, %s250
          %s252 = smul.addr %s27, 8
          %s253 = sadd.s32 %s248, %s252
          %s254 = smul.addr %s253, 128
          %s255 = scalar_lea.hbm %s2, %s254
          %s256 = sshll.u32 %s244, 4
          %s257 = int_to_ptr.vmem [resolvable:$true] %s256
          %262 = dma.vmem_to_hbm [thread:$0]  %s257, 1024, %s255, %s241, 128, 128, 8
        $region32: #{tpu_custom_call.1} parent=23 // pred_fallthru
          _
      $region24: #{tpu_custom_call.1} parent=5 // pred_fallthru
        _
      %p263 = scmp.le.s32.totalorder 2, %s18
      // Predicated region
      $region33: #{tpu_custom_call.1} parent=5 // pred_check
        %p264 = pneg %p263
      $region34: #{tpu_custom_call.1} parent=5 // pred_check_branch
        %266 = sbr.rel (%p264) target = $region36
      $region35: #{tpu_custom_call.1} parent=5 // pred_region
        %s267 = ssub.s32 %s18, 2
        // Predicated region
        $region37: #{tpu_custom_call.1} parent=35 // pred_check
          %p268 = pneg %p89
        $region38: #{tpu_custom_call.1} parent=35 // pred_check_branch
          %270 = sbr.rel (%p268) target = $region40
        $region39: #{tpu_custom_call.1} parent=35 // pred_region
          %s271 = sand.u32 %s74, 1
          %s272 = scalar_lea.sflag [#allocation6], %s271
          %s273 = sand.u32 %s74, 1
          %s274 = smul.addr %s273, 64
          %s275 = scalar_lea.vmem [#allocation7], %s274
          %276 = dma.done %s272, 1024
        $region40: #{tpu_custom_call.1} parent=35 // pred_fallthru
          _
      $region36: #{tpu_custom_call.1} parent=5 // pred_fallthru
        _
    $region6: #{tpu_custom_call.1} parent=1 // loop_footer
      %s22 = sadd.s32 1, %s18
    $region7: #{tpu_custom_call.1} parent=1 // loop_footer_branch
      %17 = sbr.rel target = $region3
    $region8: #{tpu_custom_call.1} parent=1 // loop_exit
      _
    %277 = vsyncpa [#allocation5], 1
    %s278 = scalar_lea.sflag [#allocation5], 1
    %279 = vsyncpa %s278, 1
    %280 = vsyncpa [#allocation6], 1
    %s281 = scalar_lea.sflag [#allocation6], 1
    %282 = vsyncpa %s281, 1

</llo_original>
